<compile_context>
chip_gen: v7x
topology: tpu7x:2x2x1
jax: 0.10.0
libtpu: 0.0.40
codegen_flags: <defaults>
</compile_context>

<pallas_src>
import jax
import jax.numpy as jnp
from jax import lax
from jax.experimental import pallas as pl
from jax.experimental.pallas import tpu as pltpu


def _spatial_attention_kernel(x_ref, wcat_ref, e1_ref, e2_ref, o_ref):
    # x_ref   : (B*LANE, T*D)  flattened, node-padded inputs (col index = t*D + d)
    # wcat_ref: (T*D, 2*T)     [ W12 | W3diag ]  (see wrapper)
    # e1_ref  : (N, LANE)      e1 with zero-padded columns
    # e2_ref  : (N, N)
    # o_ref   : (B, N, LANE)   lane-dense output slab (columns >= N are discarded)
    B, N, LANE = o_ref.shape
    t = wcat_ref.shape[1] // 2                       # static python int

    # Single batch-wide MXU pass over all B*LANE node rows:
    #   h[:, :t] = out2 = (X . w1) @ w2 ;  h[:, t:] = out3^T
    h = jnp.dot(x_ref[...], wcat_ref[...],
                preferred_element_type=jnp.float32)              # (B*LANE, 2T)

    e1 = e1_ref[...]                                             # (N, LANE)
    e2 = e2_ref[...]                                             # (N, N)

    # B is small and static -> fully unrolled (keeps the whole step visible to
    # the LLO scheduler; equivalent to fori_loop(unroll=True)).
    for b in range(B):
        hb = h[b * LANE:(b + 1) * LANE]                          # (LANE, 2T) static slice
        out2 = hb[:N, :t]                                        # (N, T)    real rows only
        out3t = hb[:, t:]                                        # (LANE, T) padded rows are 0

        # scores[n1, n2] = sum_t out2[n1, t] * out3t[n2, t]
        # (If MLIR ever shows a vxpose here, pl.dot(out2, out3t, trans_b=True)
        #  is the drop-in alternative; negligible at T=7.)
        scores = lax.dot_general(out2, out3t, (((1,), (1,)), ((), ())),
                                 preferred_element_type=jnp.float32)   # (N, LANE)

        s = jax.nn.sigmoid(scores + e1)                          # (N, LANE)
        e = jnp.dot(e2, s, preferred_element_type=jnp.float32)   # (N, LANE)

        # Column softmax: torch dim=1 == axis 0 of the per-batch slice.
        e = e - jnp.max(e, axis=0, keepdims=True)
        ex = jnp.exp(e)
        denom = jnp.sum(ex, axis=0, keepdims=True)               # (1, LANE)
        inv = pl.reciprocal(denom, approx=True)                  # EUP slot (free-ish)
        inv = inv * (2.0 - denom * inv)                          # one Newton step -> ~f32 exact
        o_ref[b] = (ex * inv).astype(o_ref.dtype)                # unmasked 128-lane stores


@jax.jit
def spatial_attention(x, w1, w2, w3, e1, e2):
    B, N, T, D = x.shape
    LANE = ((N + 127) // 128) * 128          # lane-dense column width
    assert 2 * T <= 128, "split wcat back into W12 / w3 path when 2T exceeds a lane tile"

    # Fold parameter-only transforms into one wide weight (wrapper-side, free):
    #   W12[t*D+d, s]    = w1[t] * w2[d, s]      -> out2   = X2 @ W12
    #   W3diag[t*D+d, s] = w3[d] * (s == t)      -> out3^T = X2 @ W3diag
    w12 = (w1[:, 0][:, None, None] * w2[None, :, :]).reshape(T * D, T)
    w3diag = (jnp.eye(T, dtype=x.dtype)[:, None, :]
              * w3[:, 0][None, :, None]).reshape(T * D, T)
    wcat = jnp.concatenate([w12, w3diag], axis=1)                        # (T*D, 2T)

    # Flatten + zero-pad the node axis to LANE so every in-kernel operand whose
    # lane axis is "nodes" is a full 128-lane slab (unmasked loads/stores).
    x2 = x.reshape(B, N, T * D)
    x2p = jnp.pad(x2, ((0, 0), (0, LANE - N), (0, 0))).reshape(B * LANE, T * D)
    e1p = jnp.pad(e1[0], ((0, 0), (0, LANE - N)))                        # (N, LANE)

    out = pl.pallas_call(
        _spatial_attention_kernel,
        out_shape=jax.ShapeDtypeStruct((B, N, LANE), jnp.float32),
        # Grid-less single step: all (small) operands live whole in VMEM; no
        # per-step pipeline overhead, weight loaded into the MXU exactly once.
        in_specs=[pl.BlockSpec(memory_space=pltpu.MemorySpace.VMEM)] * 4,
        out_specs=pl.BlockSpec(memory_space=pltpu.MemorySpace.VMEM),
    )(x2p, wcat, e1p, e2)

    return out[:, :, :N]


def reference(x, w1, w2, w3, e1, e2):
    """Pure-JAX replica of the PyTorch forward."""
    hp = jax.lax.Precision.HIGHEST
    out1 = jnp.einsum('bntd,t->bnd', x, w1[:, 0], precision=hp)
    out2 = jnp.einsum('bnd,dt->bnt', out1, w2, precision=hp)
    out3 = jnp.einsum('bntd,d->btn', x, w3[:, 0], precision=hp)
    out = jnp.einsum('bnt,btm->bnm', out2, out3, precision=hp)
    e = jnp.einsum('nm,bmk->bnk', e2, jax.nn.sigmoid(out + e1), precision=hp)
    e = e - jnp.max(e, axis=1, keepdims=True)
    ex = jnp.exp(e)
    return ex / jnp.sum(ex, axis=1, keepdims=True)


if __name__ == "__main__":
    # nodes N, features D, timesteps T (docstring: weekly data, T = 7)
    B, N, T, D = 2, 8, 7, 4

    key = jax.random.PRNGKey(0)
    k1, k2, k3, k4, k5, kx = jax.random.split(key, 6)

    x = jax.random.normal(kx, (B, N, T, D), jnp.float32)
    # xavier-uniform-like parameters
    w1 = jax.random.uniform(k1, (T, 1), jnp.float32, -0.5, 0.5)
    w2 = jax.random.uniform(k2, (D, T), jnp.float32, -0.5, 0.5)
    w3 = jax.random.uniform(k3, (D, 1), jnp.float32, -0.5, 0.5)
    e1 = jax.random.uniform(k4, (1, N, N), jnp.float32, -0.5, 0.5)
    e2 = jax.random.uniform(k5, (N, N), jnp.float32, -0.5, 0.5)

    out = spatial_attention(x, w1, w2, w3, e1, e2)
    jax.block_until_ready(out)
    assert out.shape == (B, N, N), out.shape

    ref = reference(x, w1, w2, w3, e1, e2)
    err = float(jnp.max(jnp.abs(out - ref)))
    assert err < 5e-4, f"max abs error {err}"

    # softmax over dim=1 => columns sum to 1
    col_err = float(jnp.max(jnp.abs(jnp.sum(out, axis=1) - 1.0)))
    assert col_err < 5e-4, f"column-sum error {col_err}"

    print("KERNEL_OK")
</pallas_src>

<mosaic_0001>
module attributes {stable_mosaic.version = 11 : i64} {
  func.func @_spatial_attention_kernel(%arg0: memref<256x28xf32, #tpu.memory_space<vmem>>, %arg1: memref<28x14xf32, #tpu.memory_space<vmem>>, %arg2: memref<8x128xf32, #tpu.memory_space<vmem>>, %arg3: memref<8x8xf32, #tpu.memory_space<vmem>>, %arg4: memref<2x8x128xf32, #tpu.memory_space<vmem>>) attributes {dimension_semantics = [], scalar_prefetch = 0 : i64, scratch_operands = 0 : i64, tpu.core_type = #tpu.core_type<tc>} {
    %c0 = arith.constant 0 : index
    %c0_0 = arith.constant 0 : index
    %0 = vector.load %arg0[%c0, %c0_0] : memref<256x28xf32, #tpu.memory_space<vmem>>, vector<256x28xf32>
    %c0_1 = arith.constant 0 : index
    %c0_2 = arith.constant 0 : index
    %1 = vector.load %arg1[%c0_1, %c0_2] : memref<28x14xf32, #tpu.memory_space<vmem>>, vector<28x14xf32>
    %cst = arith.constant dense<0.000000e+00> : vector<256x14xf32>
    %2 = tpu.matmul %0, %1, %cst {dimension_numbers = #tpu.dot_dimension_numbers<[1], [0], [0], [1], [0, 0, 1, 1], [], []>} : vector<256x28xf32>, vector<28x14xf32>, vector<256x14xf32> -> vector<256x14xf32>
    %c0_3 = arith.constant 0 : index
    %c0_4 = arith.constant 0 : index
    %3 = vector.load %arg2[%c0_3, %c0_4] : memref<8x128xf32, #tpu.memory_space<vmem>>, vector<8x128xf32>
    %c0_5 = arith.constant 0 : index
    %c0_6 = arith.constant 0 : index
    %4 = vector.load %arg3[%c0_5, %c0_6] : memref<8x8xf32, #tpu.memory_space<vmem>>, vector<8x8xf32>
    %5 = vector.extract_strided_slice %2 {offsets = [0, 0], sizes = [128, 14], strides = [1, 1]} : vector<256x14xf32> to vector<128x14xf32>
    %6 = vector.extract_strided_slice %5 {offsets = [0, 0], sizes = [8, 7], strides = [1, 1]} : vector<128x14xf32> to vector<8x7xf32>
    %7 = vector.extract_strided_slice %5 {offsets = [0, 7], sizes = [128, 7], strides = [1, 1]} : vector<128x14xf32> to vector<128x7xf32>
    %cst_7 = arith.constant dense<0.000000e+00> : vector<8x128xf32>
    %8 = tpu.matmul %6, %7, %cst_7 {dimension_numbers = #tpu.dot_dimension_numbers<[1], [1], [0], [0], [0, 0, 1, 0], [], []>} : vector<8x7xf32>, vector<128x7xf32>, vector<8x128xf32> -> vector<8x128xf32>
    %9 = arith.addf %8, %3 : vector<8x128xf32>
    %10 = arith.negf %9 : vector<8x128xf32>
    %11 = math.exp %10 : vector<8x128xf32>
    %cst_8 = arith.constant 1.000000e+00 : f32
    %12 = vector.broadcast %cst_8 : f32 to vector<8x128xf32>
    %13 = arith.addf %12, %11 : vector<8x128xf32>
    %14 = arith.divf %12, %13 : vector<8x128xf32>
    %cst_9 = arith.constant dense<0.000000e+00> : vector<8x128xf32>
    %15 = tpu.matmul %4, %14, %cst_9 {dimension_numbers = #tpu.dot_dimension_numbers<[1], [0], [0], [1], [0, 0, 1, 1], [], []>} : vector<8x8xf32>, vector<8x128xf32>, vector<8x128xf32> -> vector<8x128xf32>
    %cst_10 = arith.constant dense<0xFF800000> : vector<128xf32>
    %16 = vector.multi_reduction <maximumf>, %15, %cst_10 [0] : vector<8x128xf32> to vector<128xf32>
    %17 = vector.shape_cast %16 : vector<128xf32> to vector<1x128xf32>
    %18 = vector.broadcast %17 : vector<1x128xf32> to vector<8x128xf32>
    %19 = arith.subf %15, %18 : vector<8x128xf32>
    %20 = math.exp %19 : vector<8x128xf32>
    %cst_11 = arith.constant dense<0.000000e+00> : vector<128xf32>
    %21 = vector.multi_reduction <add>, %20, %cst_11 [0] : vector<8x128xf32> to vector<128xf32>
    %22 = vector.shape_cast %21 : vector<128xf32> to vector<1x128xf32>
    %23 = tpu.reciprocal %22 {approx = true} : vector<1x128xf32> -> vector<1x128xf32>
    %24 = arith.mulf %22, %23 : vector<1x128xf32>
    %cst_12 = arith.constant 2.000000e+00 : f32
    %25 = vector.broadcast %cst_12 : f32 to vector<1x128xf32>
    %26 = arith.subf %25, %24 : vector<1x128xf32>
    %27 = arith.mulf %23, %26 : vector<1x128xf32>
    %28 = vector.broadcast %27 : vector<1x128xf32> to vector<8x128xf32>
    %29 = arith.mulf %20, %28 : vector<8x128xf32>
    %c0_13 = arith.constant 0 : index
    %c0_14 = arith.constant 0 : index
    %c0_15 = arith.constant 0 : index
    %30 = vector.load %arg4[%c0_13, %c0_14, %c0_15] : memref<2x8x128xf32, #tpu.memory_space<vmem>>, vector<1x8x128xf32>
    %31 = vector.shape_cast %30 : vector<1x8x128xf32> to vector<8x128xf32>
    %32 = vector.shape_cast %29 : vector<8x128xf32> to vector<1x8x128xf32>
    tpu.vector_store %arg4[%c0_13, %c0_14, %c0_15], %32 {strides = array<i32>} : memref<2x8x128xf32, #tpu.memory_space<vmem>>, vector<1x8x128xf32>,
    %33 = vector.extract_strided_slice %2 {offsets = [128, 0], sizes = [128, 14], strides = [1, 1]} : vector<256x14xf32> to vector<128x14xf32>
    %34 = vector.extract_strided_slice %33 {offsets = [0, 0], sizes = [8, 7], strides = [1, 1]} : vector<128x14xf32> to vector<8x7xf32>
    %35 = vector.extract_strided_slice %33 {offsets = [0, 7], sizes = [128, 7], strides = [1, 1]} : vector<128x14xf32> to vector<128x7xf32>
    %cst_16 = arith.constant dense<0.000000e+00> : vector<8x128xf32>
    %36 = tpu.matmul %34, %35, %cst_16 {dimension_numbers = #tpu.dot_dimension_numbers<[1], [1], [0], [0], [0, 0, 1, 0], [], []>} : vector<8x7xf32>, vector<128x7xf32>, vector<8x128xf32> -> vector<8x128xf32>
    %37 = arith.addf %36, %3 : vector<8x128xf32>
    %38 = arith.negf %37 : vector<8x128xf32>
    %39 = math.exp %38 : vector<8x128xf32>
    %cst_17 = arith.constant 1.000000e+00 : f32
    %40 = vector.broadcast %cst_17 : f32 to vector<8x128xf32>
    %41 = arith.addf %40, %39 : vector<8x128xf32>
    %42 = arith.divf %40, %41 : vector<8x128xf32>
    %cst_18 = arith.constant dense<0.000000e+00> : vector<8x128xf32>
    %43 = tpu.matmul %4, %42, %cst_18 {dimension_numbers = #tpu.dot_dimension_numbers<[1], [0], [0], [1], [0, 0, 1, 1], [], []>} : vector<8x8xf32>, vector<8x128xf32>, vector<8x128xf32> -> vector<8x128xf32>
    %cst_19 = arith.constant dense<0xFF800000> : vector<128xf32>
    %44 = vector.multi_reduction <maximumf>, %43, %cst_19 [0] : vector<8x128xf32> to vector<128xf32>
    %45 = vector.shape_cast %44 : vector<128xf32> to vector<1x128xf32>
    %46 = vector.broadcast %45 : vector<1x128xf32> to vector<8x128xf32>
    %47 = arith.subf %43, %46 : vector<8x128xf32>
    %48 = math.exp %47 : vector<8x128xf32>
    %cst_20 = arith.constant dense<0.000000e+00> : vector<128xf32>
    %49 = vector.multi_reduction <add>, %48, %cst_20 [0] : vector<8x128xf32> to vector<128xf32>
    %50 = vector.shape_cast %49 : vector<128xf32> to vector<1x128xf32>
    %51 = tpu.reciprocal %50 {approx = true} : vector<1x128xf32> -> vector<1x128xf32>
    %52 = arith.mulf %50, %51 : vector<1x128xf32>
    %cst_21 = arith.constant 2.000000e+00 : f32
    %53 = vector.broadcast %cst_21 : f32 to vector<1x128xf32>
    %54 = arith.subf %53, %52 : vector<1x128xf32>
    %55 = arith.mulf %51, %54 : vector<1x128xf32>
    %56 = vector.broadcast %55 : vector<1x128xf32> to vector<8x128xf32>
    %57 = arith.mulf %48, %56 : vector<8x128xf32>
    %c1 = arith.constant 1 : index
    %c0_22 = arith.constant 0 : index
    %c0_23 = arith.constant 0 : index
    %58 = vector.load %arg4[%c1, %c0_22, %c0_23] : memref<2x8x128xf32, #tpu.memory_space<vmem>>, vector<1x8x128xf32>
    %59 = vector.shape_cast %58 : vector<1x8x128xf32> to vector<8x128xf32>
    %60 = vector.shape_cast %57 : vector<8x128xf32> to vector<1x8x128xf32>
    tpu.vector_store %arg4[%c1, %c0_22, %c0_23], %60 {strides = array<i32>} : memref<2x8x128xf32, #tpu.memory_space<vmem>>, vector<1x8x128xf32>,
    return
  }
}

</mosaic_0001>

<llo_original>
// kernel: spatial_attention.1
$region0: #{spatial_attention.1}
  #allocation0 [shape = 'u32[]', space=smem, size = 0x4, offset = 0x4, fixed_abs, tag = 'smem constant byte address 0x4 - core index']
  #allocation1 [shape = 'u32[144,128]{1,0:T(1,128)}', space=vmem, size = 0x12000, scoped, tag = 'internal scratch']
  %s0 = inlined_call_operand.vmem [shape: f32[256,28], index: 0, kind: input, shape index: {}]
  %s1 = inlined_call_operand.vmem [shape: f32[28,14], index: 1, kind: input, shape index: {}]
  %s2 = inlined_call_operand.vmem [shape: f32[8,128], index: 2, kind: input, shape index: {}]
  %s3 = inlined_call_operand.vmem [shape: f32[8,8], index: 3, kind: input, shape index: {}]
  %s4 = inlined_call_operand.hbm [shape: f32[2,8,128], index: 4, kind: output, shape index: {}]
  %s5 = sld [smem:[#allocation0]]
  $region26: #{spatial_attention.1} parent=0
    _
  %s7 = ssub.s32 1, %s5
  %s8 = scalar_select 0, %s7, %s5
  $region1: #{spatial_attention.1} parent=0
    #allocation2 [shape = 'u8[8192]{0}', space=vmem, size = 0x2000, scoped, tag = 'output window, operand 0, single buffered']
    #allocation3 [shape = 's32[1]{0}', space=sflag, size = 0x4, scoped, tag = 'scoped memory for spatial_attention.1']
    %9 = vsyncpa [#allocation3], 0
    // Predicated region
    $region2: #{spatial_attention.1} parent=1 // pred_check
      _
    $region3: #{spatial_attention.1} parent=1 // pred_check_branch
      %11 = sbr.rel (0) target = $region5
    $region4: #{spatial_attention.1} parent=1 // pred_region
      _
    $region5: #{spatial_attention.1} parent=1 // pred_fallthru
      _
    // Predicated region
    $region6: #{spatial_attention.1} parent=1 // pred_check
      _
    $region7: #{spatial_attention.1} parent=1 // pred_check_branch
      %13 = sbr.rel (0) target = $region9
    $region8: #{spatial_attention.1} parent=1 // pred_region
      _
    $region9: #{spatial_attention.1} parent=1 // pred_fallthru
      _
    // Predicated region
    $region10: #{spatial_attention.1} parent=1 // pred_check
      _
    $region11: #{spatial_attention.1} parent=1 // pred_check_branch
      %15 = sbr.rel (0) target = $region13
    $region12: #{spatial_attention.1} parent=1 // pred_region
      _
    $region13: #{spatial_attention.1} parent=1 // pred_fallthru
      _
    // Predicated region
    $region14: #{spatial_attention.1} parent=1 // pred_check
      _
    $region15: #{spatial_attention.1} parent=1 // pred_check_branch
      %17 = sbr.rel (0) target = $region17
    $region16: #{spatial_attention.1} parent=1 // pred_region
      _
    $region17: #{spatial_attention.1} parent=1 // pred_fallthru
      _
    %v18 = vld [vmem:[%s0] sm:$0xff]
    %v19 = vld [vmem:[%s0 + $0x8] sm:$0xff]
    %v20 = vld [vmem:[%s0 + $0x10] sm:$0xff]
    %v21 = vld [vmem:[%s0 + $0x18] sm:$0xff]
    %v22 = vld [vmem:[%s0 + $0x20] sm:$0xff]
    %v23 = vld [vmem:[%s0 + $0x28] sm:$0xff]
    %v24 = vld [vmem:[%s0 + $0x30] sm:$0xff]
    %v25 = vld [vmem:[%s0 + $0x38] sm:$0xff]
    %v26 = vld [vmem:[%s0 + $0x40] sm:$0xff]
    %v27 = vld [vmem:[%s0 + $0x48] sm:$0xff]
    %v28 = vld [vmem:[%s0 + $0x50] sm:$0xff]
    %v29 = vld [vmem:[%s0 + $0x58] sm:$0xff]
    %v30 = vld [vmem:[%s0 + $0x60] sm:$0xff]
    %v31 = vld [vmem:[%s0 + $0x68] sm:$0xff]
    %v32 = vld [vmem:[%s0 + $0x70] sm:$0xff]
    %v33 = vld [vmem:[%s0 + $0x78] sm:$0xff]
    %v34 = vld [vmem:[%s0 + $0x80] sm:$0xff]
    %v35 = vld [vmem:[%s0 + $0x88] sm:$0xff]
    %v36 = vld [vmem:[%s0 + $0x90] sm:$0xff]
    %v37 = vld [vmem:[%s0 + $0x98] sm:$0xff]
    %v38 = vld [vmem:[%s0 + $0xa0] sm:$0xff]
    %v39 = vld [vmem:[%s0 + $0xa8] sm:$0xff]
    %v40 = vld [vmem:[%s0 + $0xb0] sm:$0xff]
    %v41 = vld [vmem:[%s0 + $0xb8] sm:$0xff]
    %v42 = vld [vmem:[%s0 + $0xc0] sm:$0xff]
    %v43 = vld [vmem:[%s0 + $0xc8] sm:$0xff]
    %v44 = vld [vmem:[%s0 + $0xd0] sm:$0xff]
    %v45 = vld [vmem:[%s0 + $0xd8] sm:$0xff]
    %v46 = vld [vmem:[%s0 + $0xe0] sm:$0xff]
    %v47 = vld [vmem:[%s0 + $0xe8] sm:$0xff]
    %v48 = vld [vmem:[%s0 + $0xf0] sm:$0xff]
    %v49 = vld [vmem:[%s0 + $0xf8] sm:$0xff]
    %v50 = vld [vmem:[%s1] sm:$0xff]
    %v51 = vld [vmem:[%s1 + $0x8] sm:$0xff]
    %v52 = vld [vmem:[%s1 + $0x10] sm:$0xff]
    %v53 = vld [vmem:[%s1 + $0x18] sm:$0xf]
    %vm54 = vcmask 228352
    %v56 = vsel %vm54, %v18, 0
    %v59 = vsel %vm54, %v19, 0
    %v62 = vsel %vm54, %v20, 0
    %v65 = vsel %vm54, %v21, 0
    %v68 = vsel %vm54, %v22, 0
    %v71 = vsel %vm54, %v23, 0
    %v74 = vsel %vm54, %v24, 0
    %v77 = vsel %vm54, %v25, 0
    %v80 = vsel %vm54, %v26, 0
    %v83 = vsel %vm54, %v27, 0
    %v86 = vsel %vm54, %v28, 0
    %v89 = vsel %vm54, %v29, 0
    %v92 = vsel %vm54, %v30, 0
    %v95 = vsel %vm54, %v31, 0
    %v98 = vsel %vm54, %v32, 0
    %v101 = vsel %vm54, %v33, 0
    %v104 = vsel %vm54, %v34, 0
    %v107 = vsel %vm54, %v35, 0
    %v110 = vsel %vm54, %v36, 0
    %v113 = vsel %vm54, %v37, 0
    %v116 = vsel %vm54, %v38, 0
    %v119 = vsel %vm54, %v39, 0
    %v122 = vsel %vm54, %v40, 0
    %v125 = vsel %vm54, %v41, 0
    %v128 = vsel %vm54, %v42, 0
    %v131 = vsel %vm54, %v43, 0
    %v134 = vsel %vm54, %v44, 0
    %v137 = vsel %vm54, %v45, 0
    %v140 = vsel %vm54, %v46, 0
    %v143 = vsel %vm54, %v47, 0
    %v146 = vsel %vm54, %v48, 0
    %v149 = vsel %vm54, %v49, 0
    %vm151 = vcmask 1043456
    %v153 = vsel %vm151, %v53, 0
    %155 = vmatprep.subr.mxu0 0.0
    %156 = vmatpush1.msra.mxu0 %v50
    %157 = vmatprep.subr.mxu0 0.0
    %158 = vmatpush1.msra.mxu0 %v51
    %159 = vmatprep.subr.mxu0 0.0
    %160 = vmatpush1.msra.mxu0 %v52
    %161 = vmatprep.subr.mxu0 0.0
    %162 = vmatpush1.msra.mxu0 %v153
    %163 = vmatprep.subr.mxu0 0.0
    %164 = vmatpush1.msra.mxu0 0.0
    %165 = vmatprep.subr.mxu0 0.0
    %166 = vmatpush1.msra.mxu0 0.0
    %167 = vmatprep.subr.mxu0 0.0
    %168 = vmatpush1.msra.mxu0 0.0
    %169 = vmatprep.subr.mxu0 0.0
    %170 = vmatpush1.msra.mxu0 0.0
    %171 = vmatprep.subr.mxu0 0.0
    %172 = vmatpush1.msra.mxu0 0.0
    %173 = vmatprep.subr.mxu0 0.0
    %174 = vmatpush1.msra.mxu0 0.0
    %175 = vmatprep.subr.mxu0 0.0
    %176 = vmatpush1.msra.mxu0 0.0
    %177 = vmatprep.subr.mxu0 0.0
    %178 = vmatpush1.msra.mxu0 0.0
    %179 = vmatprep.subr.mxu0 0.0
    %180 = vmatpush1.msra.mxu0 0.0
    %181 = vmatprep.subr.mxu0 0.0
    %182 = vmatpush1.msra.mxu0 0.0
    %183 = vmatprep.subr.mxu0 0.0
    %184 = vmatpush1.msra.mxu0 0.0
    %185 = vmatprep.subr.mxu0 0.0
    %186 = vmatpush1.msra.mxu0 0.0
    %187 = vmatprep.subr.mxu0 0.0
    %188 = vmatpush1.msra.mxu0 0.0
    %189 = vmatprep.subr.mxu0 0.0
    %190 = vmatpush1.msra.mxu0 0.0
    %191 = vmatprep.subr.mxu0 0.0
    %192 = vmatpush1.msra.mxu0 0.0
    %193 = vmatprep.subr.mxu0 0.0
    %194 = vmatpush1.msra.mxu0 0.0
    %195 = vmatprep.subr.mxu0 0.0
    %196 = vmatpush1.msra.mxu0 0.0
    %197 = vmatprep.subr.mxu0 0.0
    %198 = vmatpush1.msra.mxu0 0.0
    %199 = vmatprep.subr.mxu0 0.0
    %200 = vmatpush1.msra.mxu0 0.0
    %201 = vmatprep.subr.mxu0 0.0
    %202 = vmatpush1.msra.mxu0 0.0
    %203 = vmatprep.subr.mxu0 0.0
    %204 = vmatpush1.msra.mxu0 0.0
    %205 = vmatprep.subr.mxu0 0.0
    %206 = vmatpush1.msra.mxu0 0.0
    %207 = vmatprep.subr.mxu0 0.0
    %208 = vmatpush1.msra.mxu0 0.0
    %209 = vmatprep.subr.mxu0 0.0
    %210 = vmatpush1.msra.mxu0 0.0
    %211 = vmatprep.subr.mxu0 0.0
    %212 = vmatpush1.msra.mxu0 0.0
    %213 = vmatprep.subr.mxu0 0.0
    %214 = vmatpush1.msra.mxu0 0.0
    %215 = vmatprep.subr.mxu0 0.0
    %216 = vmatpush1.msra.mxu0 0.0
    %217 = vmatprep.subr.mxu0 0.0
    %218 = vmatpush1.msra.mxu0 0.0
    %219 = vmatprep.mubr.f32.mxu0 0.0
    %220 = vmatmul.mubr.f32.gmra.mrb[0].mxu0 %v56
    %v221 = vpop.f32.mrb[0].mxu0
    %v222 = vadd.f32 0.0, %v221
    %v223 = vpop.f32.mrb[0].mxu0
    %224 = vmatprep.mubr.f32.mxu0 0.0
    %225 = vmatmul.mubr.f32.gmra.mrb[0].mxu0 %v59
    %v226 = vpop.f32.mrb[0].mxu0
    %v227 = vadd.f32 0.0, %v226
    %v228 = vpop.f32.mrb[0].mxu0
    %229 = vmatprep.mubr.f32.mxu0 0.0
    %230 = vmatmul.mubr.f32.gmra.mrb[0].mxu0 %v62
    %v231 = vpop.f32.mrb[0].mxu0
    %v232 = vadd.f32 0.0, %v231
    %v233 = vpop.f32.mrb[0].mxu0
    %234 = vmatprep.mubr.f32.mxu0 0.0
    %235 = vmatmul.mubr.f32.gmra.mrb[0].mxu0 %v65
    %v236 = vpop.f32.mrb[0].mxu0
    %v237 = vadd.f32 0.0, %v236
    %v238 = vpop.f32.mrb[0].mxu0
    %239 = vmatprep.mubr.f32.mxu0 0.0
    %240 = vmatmul.mubr.f32.gmra.mrb[0].mxu0 %v68
    %v241 = vpop.f32.mrb[0].mxu0
    %v242 = vadd.f32 0.0, %v241
    %v243 = vpop.f32.mrb[0].mxu0
    %244 = vmatprep.mubr.f32.mxu0 0.0
    %245 = vmatmul.mubr.f32.gmra.mrb[0].mxu0 %v71
    %v246 = vpop.f32.mrb[0].mxu0
    %v247 = vadd.f32 0.0, %v246
    %v248 = vpop.f32.mrb[0].mxu0
    %249 = vmatprep.mubr.f32.mxu0 0.0
    %250 = vmatmul.mubr.f32.gmra.mrb[0].mxu0 %v74
    %v251 = vpop.f32.mrb[0].mxu0
    %v252 = vadd.f32 0.0, %v251
    %v253 = vpop.f32.mrb[0].mxu0
    %254 = vmatprep.mubr.f32.mxu0 0.0
    %255 = vmatmul.mubr.f32.gmra.mrb[0].mxu0 %v77
    %v256 = vpop.f32.mrb[0].mxu0
    %v257 = vadd.f32 0.0, %v256
    %v258 = vpop.f32.mrb[0].mxu0
    %259 = vmatprep.mubr.f32.mxu0 0.0
    %260 = vmatmul.mubr.f32.gmra.mrb[0].mxu0 %v80
    %v261 = vpop.f32.mrb[0].mxu0
    %v262 = vadd.f32 0.0, %v261
    %v263 = vpop.f32.mrb[0].mxu0
    %264 = vmatprep.mubr.f32.mxu0 0.0
    %265 = vmatmul.mubr.f32.gmra.mrb[0].mxu0 %v83
    %v266 = vpop.f32.mrb[0].mxu0
    %v267 = vadd.f32 0.0, %v266
    %v268 = vpop.f32.mrb[0].mxu0
    %269 = vmatprep.mubr.f32.mxu0 0.0
    %270 = vmatmul.mubr.f32.gmra.mrb[0].mxu0 %v86
    %v271 = vpop.f32.mrb[0].mxu0
    %v272 = vadd.f32 0.0, %v271
    %v273 = vpop.f32.mrb[0].mxu0
    %274 = vmatprep.mubr.f32.mxu0 0.0
    %275 = vmatmul.mubr.f32.gmra.mrb[0].mxu0 %v89
    %v276 = vpop.f32.mrb[0].mxu0
    %v277 = vadd.f32 0.0, %v276
    %v278 = vpop.f32.mrb[0].mxu0
    %279 = vmatprep.mubr.f32.mxu0 0.0
    %280 = vmatmul.mubr.f32.gmra.mrb[0].mxu0 %v92
    %v281 = vpop.f32.mrb[0].mxu0
    %v282 = vadd.f32 0.0, %v281
    %v283 = vpop.f32.mrb[0].mxu0
    %284 = vmatprep.mubr.f32.mxu0 0.0
    %285 = vmatmul.mubr.f32.gmra.mrb[0].mxu0 %v95
    %v286 = vpop.f32.mrb[0].mxu0
    %v287 = vadd.f32 0.0, %v286
    %v288 = vpop.f32.mrb[0].mxu0
    %289 = vmatprep.mubr.f32.mxu0 0.0
    %290 = vmatmul.mubr.f32.gmra.mrb[0].mxu0 %v98
    %v291 = vpop.f32.mrb[0].mxu0
    %v292 = vadd.f32 0.0, %v291
    %v293 = vpop.f32.mrb[0].mxu0
    %294 = vmatprep.mubr.f32.mxu0 0.0
    %295 = vmatmul.mubr.f32.gmra.mrb[0].mxu0 %v101
    %v296 = vpop.f32.mrb[0].mxu0
    %v297 = vadd.f32 0.0, %v296
    %v298 = vpop.f32.mrb[0].mxu0
    %299 = vmatprep.mubr.f32.mxu0 0.0
    %300 = vmatmul.mubr.f32.gmra.mrb[0].mxu0 %v104
    %v301 = vpop.f32.mrb[0].mxu0
    %v302 = vadd.f32 0.0, %v301
    %v303 = vpop.f32.mrb[0].mxu0
    %304 = vmatprep.mubr.f32.mxu0 0.0
    %305 = vmatmul.mubr.f32.gmra.mrb[0].mxu0 %v107
    %v306 = vpop.f32.mrb[0].mxu0
    %v307 = vadd.f32 0.0, %v306
    %v308 = vpop.f32.mrb[0].mxu0
    %309 = vmatprep.mubr.f32.mxu0 0.0
    %310 = vmatmul.mubr.f32.gmra.mrb[0].mxu0 %v110
    %v311 = vpop.f32.mrb[0].mxu0
    %v312 = vadd.f32 0.0, %v311
    %v313 = vpop.f32.mrb[0].mxu0
    %314 = vmatprep.mubr.f32.mxu0 0.0
    %315 = vmatmul.mubr.f32.gmra.mrb[0].mxu0 %v113
    %v316 = vpop.f32.mrb[0].mxu0
    %v317 = vadd.f32 0.0, %v316
    %v318 = vpop.f32.mrb[0].mxu0
    %319 = vmatprep.mubr.f32.mxu0 0.0
    %320 = vmatmul.mubr.f32.gmra.mrb[0].mxu0 %v116
    %v321 = vpop.f32.mrb[0].mxu0
    %v322 = vadd.f32 0.0, %v321
    %v323 = vpop.f32.mrb[0].mxu0
    %324 = vmatprep.mubr.f32.mxu0 0.0
    %325 = vmatmul.mubr.f32.gmra.mrb[0].mxu0 %v119
    %v326 = vpop.f32.mrb[0].mxu0
    %v327 = vadd.f32 0.0, %v326
    %v328 = vpop.f32.mrb[0].mxu0
    %329 = vmatprep.mubr.f32.mxu0 0.0
    %330 = vmatmul.mubr.f32.gmra.mrb[0].mxu0 %v122
    %v331 = vpop.f32.mrb[0].mxu0
    %v332 = vadd.f32 0.0, %v331
    %v333 = vpop.f32.mrb[0].mxu0
    %334 = vmatprep.mubr.f32.mxu0 0.0
    %335 = vmatmul.mubr.f32.gmra.mrb[0].mxu0 %v125
    %v336 = vpop.f32.mrb[0].mxu0
    %v337 = vadd.f32 0.0, %v336
    %v338 = vpop.f32.mrb[0].mxu0
    %339 = vmatprep.mubr.f32.mxu0 0.0
    %340 = vmatmul.mubr.f32.gmra.mrb[0].mxu0 %v128
    %v341 = vpop.f32.mrb[0].mxu0
    %v342 = vadd.f32 0.0, %v341
    %v343 = vpop.f32.mrb[0].mxu0
    %344 = vmatprep.mubr.f32.mxu0 0.0
    %345 = vmatmul.mubr.f32.gmra.mrb[0].mxu0 %v131
    %v346 = vpop.f32.mrb[0].mxu0
    %v347 = vadd.f32 0.0, %v346
    %v348 = vpop.f32.mrb[0].mxu0
    %349 = vmatprep.mubr.f32.mxu0 0.0
    %350 = vmatmul.mubr.f32.gmra.mrb[0].mxu0 %v134
    %v351 = vpop.f32.mrb[0].mxu0
    %v352 = vadd.f32 0.0, %v351
    %v353 = vpop.f32.mrb[0].mxu0
    %354 = vmatprep.mubr.f32.mxu0 0.0
    %355 = vmatmul.mubr.f32.gmra.mrb[0].mxu0 %v137
    %v356 = vpop.f32.mrb[0].mxu0
    %v357 = vadd.f32 0.0, %v356
    %v358 = vpop.f32.mrb[0].mxu0
    %359 = vmatprep.mubr.f32.mxu0 0.0
    %360 = vmatmul.mubr.f32.gmra.mrb[0].mxu0 %v140
    %v361 = vpop.f32.mrb[0].mxu0
    %v362 = vadd.f32 0.0, %v361
    %v363 = vpop.f32.mrb[0].mxu0
    %364 = vmatprep.mubr.f32.mxu0 0.0
    %365 = vmatmul.mubr.f32.gmra.mrb[0].mxu0 %v143
    %v366 = vpop.f32.mrb[0].mxu0
    %v367 = vadd.f32 0.0, %v366
    %v368 = vpop.f32.mrb[0].mxu0
    %369 = vmatprep.mubr.f32.mxu0 0.0
    %370 = vmatmul.mubr.f32.gmra.mrb[0].mxu0 %v146
    %v371 = vpop.f32.mrb[0].mxu0
    %v372 = vadd.f32 0.0, %v371
    %v373 = vpop.f32.mrb[0].mxu0
    %374 = vmatprep.mubr.f32.mxu0 0.0
    %375 = vmatmul.mubr.f32.gmra.mrb[0].mxu0 %v149
    %v376 = vpop.f32.mrb[0].mxu0
    %v377 = vadd.f32 0.0, %v376
    %v378 = vpop.f32.mrb[0].mxu0
    %379 = vdwg.mxu0
    %v380 = vld [vmem:[%s2] sm:$0xff]
    %v381 = vld [vmem:[%s3] sm:$0xff]
    %398 = vrot.lane.b32.xlu0 %v222, 121
    %v399 = vpop.permute.xlu0 %398
    %400 = vrot.lane.b32.xlu0 %v227, 121
    %v401 = vpop.permute.xlu0 %400
    %402 = vrot.lane.b32.xlu0 %v232, 121
    %v403 = vpop.permute.xlu0 %402
    %404 = vrot.lane.b32.xlu0 %v237, 121
    %v405 = vpop.permute.xlu0 %404
    %406 = vrot.lane.b32.xlu0 %v242, 121
    %v407 = vpop.permute.xlu0 %406
    %408 = vrot.lane.b32.xlu0 %v247, 121
    %v409 = vpop.permute.xlu0 %408
    %410 = vrot.lane.b32.xlu0 %v252, 121
    %v411 = vpop.permute.xlu0 %410
    %412 = vrot.lane.b32.xlu0 %v257, 121
    %v413 = vpop.permute.xlu0 %412
    %414 = vrot.lane.b32.xlu0 %v262, 121
    %v415 = vpop.permute.xlu0 %414
    %416 = vrot.lane.b32.xlu0 %v267, 121
    %v417 = vpop.permute.xlu0 %416
    %418 = vrot.lane.b32.xlu0 %v272, 121
    %v419 = vpop.permute.xlu0 %418
    %420 = vrot.lane.b32.xlu0 %v277, 121
    %v421 = vpop.permute.xlu0 %420
    %422 = vrot.lane.b32.xlu0 %v282, 121
    %v423 = vpop.permute.xlu0 %422
    %424 = vrot.lane.b32.xlu0 %v287, 121
    %v425 = vpop.permute.xlu0 %424
    %426 = vrot.lane.b32.xlu0 %v292, 121
    %v427 = vpop.permute.xlu0 %426
    %428 = vrot.lane.b32.xlu0 %v297, 121
    %v429 = vpop.permute.xlu0 %428
    %vm430 = vcmask 56320
    %v431 = vsel %vm430, %v222, 0
    %v433 = vsel %vm430, %v399, 0
    %v435 = vsel %vm430, %v401, 0
    %v437 = vsel %vm430, %v403, 0
    %v439 = vsel %vm430, %v405, 0
    %v441 = vsel %vm430, %v407, 0
    %v443 = vsel %vm430, %v409, 0
    %v445 = vsel %vm430, %v411, 0
    %v447 = vsel %vm430, %v413, 0
    %v449 = vsel %vm430, %v415, 0
    %v451 = vsel %vm430, %v417, 0
    %v453 = vsel %vm430, %v419, 0
    %v455 = vsel %vm430, %v421, 0
    %v457 = vsel %vm430, %v423, 0
    %v459 = vsel %vm430, %v425, 0
    %v461 = vsel %vm430, %v427, 0
    %v463 = vsel %vm430, %v429, 0
    %465 = vmatprep.subr.mxu0 0.0
    %466 = vmatpush1.xpose.msra.mxu0 %v433
    %467 = vmatprep.subr.mxu0 0.0
    %468 = vmatpush1.xpose.msra.mxu0 %v435
    %469 = vmatprep.subr.mxu0 0.0
    %470 = vmatpush1.xpose.msra.mxu0 %v437
    %471 = vmatprep.subr.mxu0 0.0
    %472 = vmatpush1.xpose.msra.mxu0 %v439
    %473 = vmatprep.subr.mxu0 0.0
    %474 = vmatpush1.xpose.msra.mxu0 %v441
    %475 = vmatprep.subr.mxu0 0.0
    %476 = vmatpush1.xpose.msra.mxu0 %v443
    %477 = vmatprep.subr.mxu0 0.0
    %478 = vmatpush1.xpose.msra.mxu0 %v445
    %479 = vmatprep.subr.mxu0 0.0
    %480 = vmatpush1.xpose.msra.mxu0 %v447
    %481 = vmatprep.subr.mxu0 0.0
    %482 = vmatpush1.xpose.msra.mxu0 %v449
    %483 = vmatprep.subr.mxu0 0.0
    %484 = vmatpush1.xpose.msra.mxu0 %v451
    %485 = vmatprep.subr.mxu0 0.0
    %486 = vmatpush1.xpose.msra.mxu0 %v453
    %487 = vmatprep.subr.mxu0 0.0
    %488 = vmatpush1.xpose.msra.mxu0 %v455
    %489 = vmatprep.subr.mxu0 0.0
    %490 = vmatpush1.xpose.msra.mxu0 %v457
    %491 = vmatprep.subr.mxu0 0.0
    %492 = vmatpush1.xpose.msra.mxu0 %v459
    %493 = vmatprep.subr.mxu0 0.0
    %494 = vmatpush1.xpose.msra.mxu0 %v461
    %495 = vmatprep.subr.mxu0 0.0
    %496 = vmatpush1.xpose.msra.mxu0 %v463
    %497 = vmatprep.subr.mxu0 0.0
    %498 = vmatpush1.xpose.msra.mxu0 0.0
    %499 = vmatprep.subr.mxu0 0.0
    %500 = vmatpush1.xpose.msra.mxu0 0.0
    %501 = vmatprep.subr.mxu0 0.0
    %502 = vmatpush1.xpose.msra.mxu0 0.0
    %503 = vmatprep.subr.mxu0 0.0
    %504 = vmatpush1.xpose.msra.mxu0 0.0
    %505 = vmatprep.subr.mxu0 0.0
    %506 = vmatpush1.xpose.msra.mxu0 0.0
    %507 = vmatprep.subr.mxu0 0.0
    %508 = vmatpush1.xpose.msra.mxu0 0.0
    %509 = vmatprep.subr.mxu0 0.0
    %510 = vmatpush1.xpose.msra.mxu0 0.0
    %511 = vmatprep.subr.mxu0 0.0
    %512 = vmatpush1.xpose.msra.mxu0 0.0
    %513 = vmatprep.subr.mxu0 0.0
    %514 = vmatpush1.xpose.msra.mxu0 0.0
    %515 = vmatprep.subr.mxu0 0.0
    %516 = vmatpush1.xpose.msra.mxu0 0.0
    %517 = vmatprep.subr.mxu0 0.0
    %518 = vmatpush1.xpose.msra.mxu0 0.0
    %519 = vmatprep.subr.mxu0 0.0
    %520 = vmatpush1.xpose.msra.mxu0 0.0
    %521 = vmatprep.subr.mxu0 0.0
    %522 = vmatpush1.xpose.msra.mxu0 0.0
    %523 = vmatprep.subr.mxu0 0.0
    %524 = vmatpush1.xpose.msra.mxu0 0.0
    %525 = vmatprep.subr.mxu0 0.0
    %526 = vmatpush1.xpose.msra.mxu0 0.0
    %527 = vmatprep.subr.mxu0 0.0
    %528 = vmatpush1.xpose.msra.mxu0 0.0
    %529 = vmatprep.mubr.f32.mxu0 0.0
    %530 = vmatmul.mubr.f32.gmra.mrb[0].mxu0 %v431
    %v531 = vpop.f32.mrb[0].mxu0
    %v532 = vadd.f32 %v380, %v531
    %v533 = vpop.f32.mrb[0].mxu0
    %534 = vdwg.mxu0
    %v535 = vxor.u32 %v532, 2147483648
    %v536 = vmul.f32 %v535, 1.442695
    %v537 = vpow.pop %v536
    %v538 = vadd.f32 %v537, 1.0
    %v539 = vrcp.pop %v538
    %v540 = vmul.f32 1.0, %v539
    %vm541 = vcmask 64512
    %v543 = vsel %vm541, %v381, 0
    %545 = vmatprep.subr.mxu0 0.0
    %546 = vmatpush1.msra.mxu0 %v540
    %547 = vmatprep.subr.mxu0 0.0
    %548 = vmatpush1.msra.mxu0 0.0
    %549 = vmatprep.subr.mxu0 0.0
    %550 = vmatpush1.msra.mxu0 0.0
    %551 = vmatprep.subr.mxu0 0.0
    %552 = vmatpush1.msra.mxu0 0.0
    %553 = vmatprep.subr.mxu0 0.0
    %554 = vmatpush1.msra.mxu0 0.0
    %555 = vmatprep.subr.mxu0 0.0
    %556 = vmatpush1.msra.mxu0 0.0
    %557 = vmatprep.subr.mxu0 0.0
    %558 = vmatpush1.msra.mxu0 0.0
    %559 = vmatprep.subr.mxu0 0.0
    %560 = vmatpush1.msra.mxu0 0.0
    %561 = vmatprep.subr.mxu0 0.0
    %562 = vmatpush1.msra.mxu0 0.0
    %563 = vmatprep.subr.mxu0 0.0
    %564 = vmatpush1.msra.mxu0 0.0
    %565 = vmatprep.subr.mxu0 0.0
    %566 = vmatpush1.msra.mxu0 0.0
    %567 = vmatprep.subr.mxu0 0.0
    %568 = vmatpush1.msra.mxu0 0.0
    %569 = vmatprep.subr.mxu0 0.0
    %570 = vmatpush1.msra.mxu0 0.0
    %571 = vmatprep.subr.mxu0 0.0
    %572 = vmatpush1.msra.mxu0 0.0
    %573 = vmatprep.subr.mxu0 0.0
    %574 = vmatpush1.msra.mxu0 0.0
    %575 = vmatprep.subr.mxu0 0.0
    %576 = vmatpush1.msra.mxu0 0.0
    %577 = vmatprep.subr.mxu0 0.0
    %578 = vmatpush1.msra.mxu0 0.0
    %579 = vmatprep.subr.mxu0 0.0
    %580 = vmatpush1.msra.mxu0 0.0
    %581 = vmatprep.subr.mxu0 0.0
    %582 = vmatpush1.msra.mxu0 0.0
    %583 = vmatprep.subr.mxu0 0.0
    %584 = vmatpush1.msra.mxu0 0.0
    %585 = vmatprep.subr.mxu0 0.0
    %586 = vmatpush1.msra.mxu0 0.0
    %587 = vmatprep.subr.mxu0 0.0
    %588 = vmatpush1.msra.mxu0 0.0
    %589 = vmatprep.subr.mxu0 0.0
    %590 = vmatpush1.msra.mxu0 0.0
    %591 = vmatprep.subr.mxu0 0.0
    %592 = vmatpush1.msra.mxu0 0.0
    %593 = vmatprep.subr.mxu0 0.0
    %594 = vmatpush1.msra.mxu0 0.0
    %595 = vmatprep.subr.mxu0 0.0
    %596 = vmatpush1.msra.mxu0 0.0
    %597 = vmatprep.subr.mxu0 0.0
    %598 = vmatpush1.msra.mxu0 0.0
    %599 = vmatprep.subr.mxu0 0.0
    %600 = vmatpush1.msra.mxu0 0.0
    %601 = vmatprep.subr.mxu0 0.0
    %602 = vmatpush1.msra.mxu0 0.0
    %603 = vmatprep.subr.mxu0 0.0
    %604 = vmatpush1.msra.mxu0 0.0
    %605 = vmatprep.subr.mxu0 0.0
    %606 = vmatpush1.msra.mxu0 0.0
    %607 = vmatprep.subr.mxu0 0.0
    %608 = vmatpush1.msra.mxu0 0.0
    %609 = vmatprep.mubr.f32.mxu0 0.0
    %610 = vmatmul.mubr.f32.gmra.mrb[0].mxu0 %v543
    %v611 = vpop.f32.mrb[0].mxu0
    %v612 = vadd.f32 0.0, %v611
    %v613 = vpop.f32.mrb[0].mxu0
    %614 = vdwg.mxu0
    %v615 = vrot.slane %v612, 4
    %v616 = vmax.f32 %v612, %v615
    %v617 = vrot.slane %v616, 2
    %v618 = vmax.f32 %v616, %v617
    %v619 = vrot.slane %v618, 1
    %v620 = vmax.f32 %v618, %v619
    %v621 = vsub.f32 %v612, %v620
    %v622 = vmul.f32 %v621, 1.442695
    %v623 = vpow.pop %v622
    %v624 = vrot.slane %v623, 4
    %v625 = vadd.f32 %v623, %v624
    %v626 = vrot.slane %v625, 2
    %v627 = vadd.f32 %v625, %v626
    %v628 = vrot.slane %v627, 1
    %v629 = vadd.f32 %v627, %v628
    %v630 = vrcp.pop %v629
    %v631 = vmul.f32 %v629, %v630
    %v632 = vsub.f32 2.0, %v631
    %v633 = vmul.f32 %v630, %v632
    %v634 = vmul.f32 %v623, %v633
    %635 = vst [vmem:[#allocation2] sm:$0xff] %v634
    %652 = vrot.lane.b32.xlu0 %v302, 121
    %v653 = vpop.permute.xlu0 %652
    %654 = vrot.lane.b32.xlu0 %v307, 121
    %v655 = vpop.permute.xlu0 %654
    %656 = vrot.lane.b32.xlu0 %v312, 121
    %v657 = vpop.permute.xlu0 %656
    %658 = vrot.lane.b32.xlu0 %v317, 121
    %v659 = vpop.permute.xlu0 %658
    %660 = vrot.lane.b32.xlu0 %v322, 121
    %v661 = vpop.permute.xlu0 %660
    %662 = vrot.lane.b32.xlu0 %v327, 121
    %v663 = vpop.permute.xlu0 %662
    %664 = vrot.lane.b32.xlu0 %v332, 121
    %v665 = vpop.permute.xlu0 %664
    %666 = vrot.lane.b32.xlu0 %v337, 121
    %v667 = vpop.permute.xlu0 %666
    %668 = vrot.lane.b32.xlu0 %v342, 121
    %v669 = vpop.permute.xlu0 %668
    %670 = vrot.lane.b32.xlu0 %v347, 121
    %v671 = vpop.permute.xlu0 %670
    %672 = vrot.lane.b32.xlu0 %v352, 121
    %v673 = vpop.permute.xlu0 %672
    %674 = vrot.lane.b32.xlu0 %v357, 121
    %v675 = vpop.permute.xlu0 %674
    %676 = vrot.lane.b32.xlu0 %v362, 121
    %v677 = vpop.permute.xlu0 %676
    %678 = vrot.lane.b32.xlu0 %v367, 121
    %v679 = vpop.permute.xlu0 %678
    %680 = vrot.lane.b32.xlu0 %v372, 121
    %v681 = vpop.permute.xlu0 %680
    %682 = vrot.lane.b32.xlu0 %v377, 121
    %v683 = vpop.permute.xlu0 %682
    %v684 = vsel %vm430, %v302, 0
    %v686 = vsel %vm430, %v653, 0
    %v688 = vsel %vm430, %v655, 0
    %v690 = vsel %vm430, %v657, 0
    %v692 = vsel %vm430, %v659, 0
    %v694 = vsel %vm430, %v661, 0
    %v696 = vsel %vm430, %v663, 0
    %v698 = vsel %vm430, %v665, 0
    %v700 = vsel %vm430, %v667, 0
    %v702 = vsel %vm430, %v669, 0
    %v704 = vsel %vm430, %v671, 0
    %v706 = vsel %vm430, %v673, 0
    %v708 = vsel %vm430, %v675, 0
    %v710 = vsel %vm430, %v677, 0
    %v712 = vsel %vm430, %v679, 0
    %v714 = vsel %vm430, %v681, 0
    %v716 = vsel %vm430, %v683, 0
    %718 = vmatprep.subr.mxu0 0.0
    %719 = vmatpush1.xpose.msra.mxu0 %v686
    %720 = vmatprep.subr.mxu0 0.0
    %721 = vmatpush1.xpose.msra.mxu0 %v688
    %722 = vmatprep.subr.mxu0 0.0
    %723 = vmatpush1.xpose.msra.mxu0 %v690
    %724 = vmatprep.subr.mxu0 0.0
    %725 = vmatpush1.xpose.msra.mxu0 %v692
    %726 = vmatprep.subr.mxu0 0.0
    %727 = vmatpush1.xpose.msra.mxu0 %v694
    %728 = vmatprep.subr.mxu0 0.0
    %729 = vmatpush1.xpose.msra.mxu0 %v696
    %730 = vmatprep.subr.mxu0 0.0
    %731 = vmatpush1.xpose.msra.mxu0 %v698
    %732 = vmatprep.subr.mxu0 0.0
    %733 = vmatpush1.xpose.msra.mxu0 %v700
    %734 = vmatprep.subr.mxu0 0.0
    %735 = vmatpush1.xpose.msra.mxu0 %v702
    %736 = vmatprep.subr.mxu0 0.0
    %737 = vmatpush1.xpose.msra.mxu0 %v704
    %738 = vmatprep.subr.mxu0 0.0
    %739 = vmatpush1.xpose.msra.mxu0 %v706
    %740 = vmatprep.subr.mxu0 0.0
    %741 = vmatpush1.xpose.msra.mxu0 %v708
    %742 = vmatprep.subr.mxu0 0.0
    %743 = vmatpush1.xpose.msra.mxu0 %v710
    %744 = vmatprep.subr.mxu0 0.0
    %745 = vmatpush1.xpose.msra.mxu0 %v712
    %746 = vmatprep.subr.mxu0 0.0
    %747 = vmatpush1.xpose.msra.mxu0 %v714
    %748 = vmatprep.subr.mxu0 0.0
    %749 = vmatpush1.xpose.msra.mxu0 %v716
    %750 = vmatprep.subr.mxu0 0.0
    %751 = vmatpush1.xpose.msra.mxu0 0.0
    %752 = vmatprep.subr.mxu0 0.0
    %753 = vmatpush1.xpose.msra.mxu0 0.0
    %754 = vmatprep.subr.mxu0 0.0
    %755 = vmatpush1.xpose.msra.mxu0 0.0
    %756 = vmatprep.subr.mxu0 0.0
    %757 = vmatpush1.xpose.msra.mxu0 0.0
    %758 = vmatprep.subr.mxu0 0.0
    %759 = vmatpush1.xpose.msra.mxu0 0.0
    %760 = vmatprep.subr.mxu0 0.0
    %761 = vmatpush1.xpose.msra.mxu0 0.0
    %762 = vmatprep.subr.mxu0 0.0
    %763 = vmatpush1.xpose.msra.mxu0 0.0
    %764 = vmatprep.subr.mxu0 0.0
    %765 = vmatpush1.xpose.msra.mxu0 0.0
    %766 = vmatprep.subr.mxu0 0.0
    %767 = vmatpush1.xpose.msra.mxu0 0.0
    %768 = vmatprep.subr.mxu0 0.0
    %769 = vmatpush1.xpose.msra.mxu0 0.0
    %770 = vmatprep.subr.mxu0 0.0
    %771 = vmatpush1.xpose.msra.mxu0 0.0
    %772 = vmatprep.subr.mxu0 0.0
    %773 = vmatpush1.xpose.msra.mxu0 0.0
    %774 = vmatprep.subr.mxu0 0.0
    %775 = vmatpush1.xpose.msra.mxu0 0.0
    %776 = vmatprep.subr.mxu0 0.0
    %777 = vmatpush1.xpose.msra.mxu0 0.0
    %778 = vmatprep.subr.mxu0 0.0
    %779 = vmatpush1.xpose.msra.mxu0 0.0
    %780 = vmatprep.subr.mxu0 0.0
    %781 = vmatpush1.xpose.msra.mxu0 0.0
    %782 = vmatprep.mubr.f32.mxu0 0.0
    %783 = vmatmul.mubr.f32.gmra.mrb[0].mxu0 %v684
    %v784 = vpop.f32.mrb[0].mxu0
    %v785 = vadd.f32 %v380, %v784
    %v786 = vpop.f32.mrb[0].mxu0
    %787 = vdwg.mxu0
    %v788 = vxor.u32 %v785, 2147483648
    %v789 = vmul.f32 %v788, 1.442695
    %v790 = vpow.pop %v789
    %v791 = vadd.f32 %v790, 1.0
    %v792 = vrcp.pop %v791
    %v793 = vmul.f32 1.0, %v792
    %794 = vmatprep.subr.mxu0 0.0
    %795 = vmatpush1.msra.mxu0 %v793
    %796 = vmatprep.subr.mxu0 0.0
    %797 = vmatpush1.msra.mxu0 0.0
    %798 = vmatprep.subr.mxu0 0.0
    %799 = vmatpush1.msra.mxu0 0.0
    %800 = vmatprep.subr.mxu0 0.0
    %801 = vmatpush1.msra.mxu0 0.0
    %802 = vmatprep.subr.mxu0 0.0
    %803 = vmatpush1.msra.mxu0 0.0
    %804 = vmatprep.subr.mxu0 0.0
    %805 = vmatpush1.msra.mxu0 0.0
    %806 = vmatprep.subr.mxu0 0.0
    %807 = vmatpush1.msra.mxu0 0.0
    %808 = vmatprep.subr.mxu0 0.0
    %809 = vmatpush1.msra.mxu0 0.0
    %810 = vmatprep.subr.mxu0 0.0
    %811 = vmatpush1.msra.mxu0 0.0
    %812 = vmatprep.subr.mxu0 0.0
    %813 = vmatpush1.msra.mxu0 0.0
    %814 = vmatprep.subr.mxu0 0.0
    %815 = vmatpush1.msra.mxu0 0.0
    %816 = vmatprep.subr.mxu0 0.0
    %817 = vmatpush1.msra.mxu0 0.0
    %818 = vmatprep.subr.mxu0 0.0
    %819 = vmatpush1.msra.mxu0 0.0
    %820 = vmatprep.subr.mxu0 0.0
    %821 = vmatpush1.msra.mxu0 0.0
    %822 = vmatprep.subr.mxu0 0.0
    %823 = vmatpush1.msra.mxu0 0.0
    %824 = vmatprep.subr.mxu0 0.0
    %825 = vmatpush1.msra.mxu0 0.0
    %826 = vmatprep.subr.mxu0 0.0
    %827 = vmatpush1.msra.mxu0 0.0
    %828 = vmatprep.subr.mxu0 0.0
    %829 = vmatpush1.msra.mxu0 0.0
    %830 = vmatprep.subr.mxu0 0.0
    %831 = vmatpush1.msra.mxu0 0.0
    %832 = vmatprep.subr.mxu0 0.0
    %833 = vmatpush1.msra.mxu0 0.0
    %834 = vmatprep.subr.mxu0 0.0
    %835 = vmatpush1.msra.mxu0 0.0
    %836 = vmatprep.subr.mxu0 0.0
    %837 = vmatpush1.msra.mxu0 0.0
    %838 = vmatprep.subr.mxu0 0.0
    %839 = vmatpush1.msra.mxu0 0.0
    %840 = vmatprep.subr.mxu0 0.0
    %841 = vmatpush1.msra.mxu0 0.0
    %842 = vmatprep.subr.mxu0 0.0
    %843 = vmatpush1.msra.mxu0 0.0
    %844 = vmatprep.subr.mxu0 0.0
    %845 = vmatpush1.msra.mxu0 0.0
    %846 = vmatprep.subr.mxu0 0.0
    %847 = vmatpush1.msra.mxu0 0.0
    %848 = vmatprep.subr.mxu0 0.0
    %849 = vmatpush1.msra.mxu0 0.0
    %850 = vmatprep.subr.mxu0 0.0
    %851 = vmatpush1.msra.mxu0 0.0
    %852 = vmatprep.subr.mxu0 0.0
    %853 = vmatpush1.msra.mxu0 0.0
    %854 = vmatprep.subr.mxu0 0.0
    %855 = vmatpush1.msra.mxu0 0.0
    %856 = vmatprep.subr.mxu0 0.0
    %857 = vmatpush1.msra.mxu0 0.0
    %858 = vmatprep.mubr.f32.mxu0 0.0
    %859 = vmatmul.mubr.f32.gmra.mrb[0].mxu0 %v543
    %v860 = vpop.f32.mrb[0].mxu0
    %v861 = vadd.f32 0.0, %v860
    %v862 = vpop.f32.mrb[0].mxu0
    %863 = vdwg.mxu0
    %v864 = vrot.slane %v861, 4
    %v865 = vmax.f32 %v861, %v864
    %v866 = vrot.slane %v865, 2
    %v867 = vmax.f32 %v865, %v866
    %v868 = vrot.slane %v867, 1
    %v869 = vmax.f32 %v867, %v868
    %v870 = vsub.f32 %v861, %v869
    %v871 = vmul.f32 %v870, 1.442695
    %v872 = vpow.pop %v871
    %v873 = vrot.slane %v872, 4
    %v874 = vadd.f32 %v872, %v873
    %v875 = vrot.slane %v874, 2
    %v876 = vadd.f32 %v874, %v875
    %v877 = vrot.slane %v876, 1
    %v878 = vadd.f32 %v876, %v877
    %v879 = vrcp.pop %v878
    %v880 = vmul.f32 %v878, %v879
    %v881 = vsub.f32 2.0, %v880
    %v882 = vmul.f32 %v879, %v881
    %v883 = vmul.f32 %v872, %v882
    %s884 = scalar_lea.vmem [#allocation2], 8
    %885 = vst [vmem:[%s884] sm:$0xff] %v883
    // Predicated region
    $region18: #{spatial_attention.1} parent=1 // pred_check
      _
    $region19: #{spatial_attention.1} parent=1 // pred_check_branch
      %887 = sbr.rel (0) target = $region21
    $region20: #{spatial_attention.1} parent=1 // pred_region
      %s889 = ssub.s32 256, 256
      %890 = vsyncadd [#allocation3], %s889
      %s891 = sshll.u32 [#allocation2], 4
      %s892 = int_to_ptr.vmem [resolvable:$true] %s891
      %897 = dma.vmem_to_hbm [thread:$0]  %s892, 256, %s4, [#allocation3], 128, 128, 8
    $region21: #{spatial_attention.1} parent=1 // pred_fallthru
      _
    // Predicated region
    $region22: #{spatial_attention.1} parent=1 // pred_check
      _
    $region23: #{spatial_attention.1} parent=1 // pred_check_branch
      %899 = sbr.rel (0) target = $region25
    $region24: #{spatial_attention.1} parent=1 // pred_region
      %900 = dma.done [#allocation3], 256
    $region25: #{spatial_attention.1} parent=1 // pred_fallthru
      _
    %901 = vsyncpa [#allocation3], 1

</llo_original>
